<compile_context>
chip_gen: v6e
topology: v6e:2x2x1
jax: 0.10.0
libtpu: 0.0.40
codegen_flags: <defaults>
</compile_context>

<pallas_src>
import math

import jax
import jax.numpy as jnp
from jax.experimental import pallas as pl
from jax.experimental.pallas import tpu as pltpu

_LANES = 128              # vreg lane width; blocks always span the full last dim
_MAX_TILE_ROWS = 2048     # 2048 x 128 f32 = 1 MiB per buffer (in+out double-buffered ~4 MiB)
_MIN_PALLAS_SIZE = 16384  # below this, a fused XLA elementwise op beats kernel launch overhead


def _round_up(a: int, m: int) -> int:
    return ((a + m - 1) // m) * m


def poseidon_noise_scheduler(t: jax.Array,
                             sigma_min: float = 1e-05,
                             sigma_max: float = 1000.0,
                             spread: float = 2.0,
                             *,
                             min_pallas_size: int = _MIN_PALLAS_SIZE) -> jax.Array:
    """Log-logit noise schedule: sigma_t = sqrt(sigma_min*sigma_max) * exp(spread*logit(x))."""
    # Compile-time scalar constants (spread is a Python float in the module's __init__).
    s = float(spread)
    eps = math.sqrt(sigma_min / sigma_max) ** (1.0 / s)
    log_sigma_med = math.log(sigma_min * sigma_max) / 2.0
    sigma_med = math.exp(log_sigma_med)          # = sqrt(sigma_min * sigma_max)
    scale = 1.0 - 2.0 * eps

    # Is spread a small positive integer or half-integer? -> transcendental-free path.
    two_s = 2.0 * s
    nice_spread = (s > 0.0) and (two_s == float(int(two_s))) and (int(two_s) <= 16)

    def _sigma_from_x(x):
        """x = t*(1-2eps)+eps in (0,1), float32 -> sigma (float32)."""
        if nice_spread:
            r = x / (1.0 - x)                    # exact divide; logit(x) = log(r)
            k2 = int(two_s)
            k, half = divmod(k2, 2)              # spread = k + half/2
            acc = None
            for _ in range(k):                   # pure VPU multiplies
                acc = r if acc is None else acc * r
            if half:
                sq = jnp.sqrt(r)                 # single EUP op for half-integer spread
                acc = sq if acc is None else acc * sq
            return sigma_med * acc
        # General spread: one log + one exp; log(x)-log1p(-x) keeps precision near x->1.
        logit = jnp.log(x) - jnp.log1p(-x)
        return jnp.exp(s * logit + log_sigma_med)

    orig_shape = t.shape
    n = t.size

    # ---- Fast path: tiny inputs (e.g. B=2) -> single fused XLA elementwise op. ----
    if n < max(int(min_pallas_size), 1):
        x = t.astype(jnp.float32) * scale + eps
        return _sigma_from_x(x).astype(t.dtype).reshape(orig_shape)

    # ---- Pallas path: lane-dense (rows, 128) slab. ----
    def kernel(t_ref, o_ref):
        x = t_ref[...].astype(jnp.float32) * scale + eps
        o_ref[...] = _sigma_from_x(x).astype(o_ref.dtype)

    rows = pl.cdiv(n, _LANES)
    n_padded = rows * _LANES

    t_flat = jnp.ravel(t)
    if n_padded != n:
        # Pad only to the next multiple of 128 (needed for the reshape); padded
        # entries map to x = eps -> finite result, sliced off afterwards.
        t_flat = jnp.pad(t_flat, (0, n_padded - n))
    t2d = t_flat.reshape(rows, _LANES)

    if rows < 16:
        # Single block spanning the full array (block_shape == array dims is
        # always layout-legal, even when rows is not a multiple of 8).
        tile_rows = rows
    else:
        # At least 2 grid steps so v7x's two TensorCores both get work; tile_rows
        # is a multiple of 8 and capped at 2048 rows (1 MiB/buffer).
        tile_rows = min(_MAX_TILE_ROWS, _round_up(pl.cdiv(rows, 2), 8))
    grid = (pl.cdiv(rows, tile_rows),)   # ragged final block is masked by Pallas

    out2d = pl.pallas_call(
        kernel,
        out_shape=jax.ShapeDtypeStruct((rows, _LANES), t.dtype),
        grid=grid,
        in_specs=[pl.BlockSpec((tile_rows, _LANES), lambda i: (i, 0))],
        out_specs=pl.BlockSpec((tile_rows, _LANES), lambda i: (i, 0)),
        compiler_params=pltpu.CompilerParams(
            dimension_semantics=("parallel",)),   # shards tiles across v7x's 2 TCs
    )(t2d)

    out_flat = out2d.reshape(-1)
    if n_padded != n:
        out_flat = out_flat[:n]               # only pay the slice when we padded
    return out_flat.reshape(orig_shape)


def _reference(t, sigma_min=1e-05, sigma_max=1000.0, spread=2.0):
    """Pure-JAX reference matching the PyTorch module exactly."""
    eps = math.sqrt(sigma_min / sigma_max) ** (1.0 / spread)
    log_sigma_med = math.log(sigma_min * sigma_max) / 2.0
    x = t * (1.0 - 2.0 * eps) + eps
    logit = jnp.log(x) - jnp.log1p(-x)
    return jnp.exp(spread * logit + log_sigma_med)


if __name__ == "__main__":
    key = jax.random.PRNGKey(0)
    k1, k2 = jax.random.split(key)

    # Primary case from the module docstring: t of shape (B, 1), B = 2.
    t_small = jax.random.uniform(k1, (2, 1), dtype=jnp.float32,
                                 minval=0.05, maxval=0.95)
    ref_small = _reference(t_small)

    # 1) Default: tiny input takes the fused-XLA fast path (no Pallas overhead).
    out_fast = jax.block_until_ready(poseidon_noise_scheduler(t_small))
    assert out_fast.shape == t_small.shape and out_fast.dtype == t_small.dtype
    assert jnp.allclose(out_fast, ref_small, rtol=5e-5, atol=1e-7), (out_fast, ref_small)

    # 2) Force the Pallas kernel on the primary shape (single ragged block).
    out_pk = jax.block_until_ready(
        poseidon_noise_scheduler(t_small, min_pallas_size=0))
    assert out_pk.shape == t_small.shape and out_pk.dtype == t_small.dtype
    assert jnp.allclose(out_pk, ref_small, rtol=5e-5, atol=1e-7), (out_pk, ref_small)

    # 3) Pallas path with 128-padding, >=2 grid steps and a ragged final block.
    t_mid = jax.random.uniform(k2, (4097, 1), dtype=jnp.float32,
                               minval=0.05, maxval=0.95)
    out_mid = jax.block_until_ready(
        poseidon_noise_scheduler(t_mid, min_pallas_size=0))
    ref_mid = _reference(t_mid)
    assert out_mid.shape == t_mid.shape and out_mid.dtype == t_mid.dtype
    assert jnp.allclose(out_mid, ref_mid, rtol=5e-5, atol=1e-7)

    # 4) Non-default spreads exercise the half-integer and general kernel branches.
    out_half = jax.block_until_ready(
        poseidon_noise_scheduler(t_small, spread=2.5, min_pallas_size=0))
    assert jnp.allclose(out_half, _reference(t_small, spread=2.5), rtol=5e-5, atol=1e-7)
    out_gen = jax.block_until_ready(
        poseidon_noise_scheduler(t_small, spread=1.7, min_pallas_size=0))
    assert jnp.allclose(out_gen, _reference(t_small, spread=1.7), rtol=5e-5, atol=1e-7)

    print("KERNEL_OK")
</pallas_src>

<mosaic_0001>
module attributes {stable_mosaic.version = 11 : i64} {
  func.func @kernel(%arg0: i32, %arg1: memref<1x128xf32, #tpu.memory_space<vmem>>, %arg2: memref<1x128xf32, #tpu.memory_space<vmem>>) attributes {dimension_semantics = [#tpu.dimension_semantics<parallel>], iteration_bounds = array<i64: 1>, scalar_prefetch = 0 : i64, scratch_operands = 0 : i64, tpu.core_type = #tpu.core_type<tc>, window_params = [{transform_indices = @transform_0, window_bounds = array<i64: 1, 128>}, {transform_indices = @transform_1, window_bounds = array<i64: 1, 128>}]} {
    %c0 = arith.constant 0 : index
    %c0_0 = arith.constant 0 : index
    %0 = vector.load %arg1[%c0, %c0_0] : memref<1x128xf32, #tpu.memory_space<vmem>>, vector<1x128xf32>
    %cst = arith.constant 9.800000e-01 : f32
    %1 = vector.broadcast %cst : f32 to vector<1x128xf32>
    %2 = arith.mulf %0, %1 : vector<1x128xf32>
    %cst_1 = arith.constant 0.00999999977 : f32
    %3 = vector.broadcast %cst_1 : f32 to vector<1x128xf32>
    %4 = arith.addf %2, %3 : vector<1x128xf32>
    %cst_2 = arith.constant 1.000000e+00 : f32
    %5 = vector.broadcast %cst_2 : f32 to vector<1x128xf32>
    %6 = arith.subf %5, %4 : vector<1x128xf32>
    %7 = arith.divf %4, %6 : vector<1x128xf32>
    %8 = arith.mulf %7, %7 : vector<1x128xf32>
    %cst_3 = arith.constant 1.000000e-01 : f32
    %9 = vector.broadcast %cst_3 : f32 to vector<1x128xf32>
    %10 = arith.mulf %9, %8 : vector<1x128xf32>
    %c0_4 = arith.constant 0 : index
    %c0_5 = arith.constant 0 : index
    %11 = vector.load %arg2[%c0_4, %c0_5] : memref<1x128xf32, #tpu.memory_space<vmem>>, vector<1x128xf32>
    tpu.vector_store %arg2[%c0_4, %c0_5], %10 {strides = array<i32>} : memref<1x128xf32, #tpu.memory_space<vmem>>, vector<1x128xf32>,
    return
  }
  func.func @transform_0(%arg0: i32) -> (i32, i32) {
    %c0_i32 = arith.constant 0 : i32
    %c0_i32_0 = arith.constant 0 : i32
    return %arg0, %c0_i32 : i32, i32
  }
  func.func @transform_1(%arg0: i32) -> (i32, i32) {
    %c0_i32 = arith.constant 0 : i32
    %c0_i32_0 = arith.constant 0 : i32
    return %arg0, %c0_i32 : i32, i32
  }
}

</mosaic_0001>

<llo_original>
// kernel: tpu_custom_call.1
$region0: #{tpu_custom_call.1}
  #allocation0 [shape = 'u32[]', space=smem, size = 0x4, offset = 0x4, fixed_abs, tag = 'smem constant byte address 0x4 - core index']
  #allocation1 [shape = 'u32[144,128]{1,0:T(1,128)}', space=vmem, size = 0x12000, scoped, tag = 'internal scratch']
  %s0 = inlined_call_operand.hbm [shape: f32[1,128], index: 0, kind: input, shape index: {}]
  %s1 = inlined_call_operand.hbm [shape: f32[1,128], index: 1, kind: output, shape index: {}]
  %s2 = sld [smem:[#allocation0]]
  $region18: #{tpu_custom_call.1} parent=0
    _
  %s4 = ssub.s32 1, %s2
  %s5 = scalar_select 0, %s4, %s2
  $region1: #{tpu_custom_call.1} parent=0
    #allocation2 [shape = 'u8[512]{0}', space=vmem, size = 0x400, scoped, tag = 'input window, operand 0, single buffered']
    #allocation3 [shape = 's32[1]{0}', space=sflag, size = 0x4, scoped, tag = 'scoped memory for tpu_custom_call.1']
    #allocation4 [shape = 's32[1]{0}', space=sflag, size = 0x4, scoped, tag = 'scoped memory for tpu_custom_call.1']
    #allocation5 [shape = 'u8[512]{0}', space=vmem, size = 0x400, scoped, tag = 'output window, operand 0, single buffered']
    %6 = vsyncpa [#allocation3], 0
    %7 = vsyncpa [#allocation4], 0
    // Predicated region
    $region2: #{tpu_custom_call.1} parent=1 // pred_check
      _
    $region3: #{tpu_custom_call.1} parent=1 // pred_check_branch
      %9 = sbr.rel (0) target = $region5
    $region4: #{tpu_custom_call.1} parent=1 // pred_region
      %s11 = ssub.s32 16, 16
      %12 = vsyncadd [#allocation3], %s11
      %s14 = sshll.u32 [#allocation2], 4
      %s15 = int_to_ptr.vmem [resolvable:$true] %s14
      %17 = dma.hbm_to_vmem [thread:$0]  %s0, 16, %s15, [#allocation3]
    $region5: #{tpu_custom_call.1} parent=1 // pred_fallthru
      _
    // Predicated region
    $region6: #{tpu_custom_call.1} parent=1 // pred_check
      _
    $region7: #{tpu_custom_call.1} parent=1 // pred_check_branch
      %19 = sbr.rel (0) target = $region9
    $region8: #{tpu_custom_call.1} parent=1 // pred_region
      %20 = dma.done [#allocation3], 16
    $region9: #{tpu_custom_call.1} parent=1 // pred_fallthru
      _
    %v21 = vld [vmem:[#allocation2] sm:$0x1]
    %v22 = vmul.f32 %v21, 0.98
    %v23 = vadd.f32 %v22, 0.01
    %v24 = vsub.f32 1.0, %v23
    %v25 = vrcp.pop %v24
    %v26 = vmul.f32 %v23, %v25
    %v27 = vmul.f32 %v26, %v26
    %v28 = vmul.f32 %v27, 0.1
    %29 = vst [vmem:[#allocation5] sm:$0x1] %v28
    // Predicated region
    $region10: #{tpu_custom_call.1} parent=1 // pred_check
      _
    $region11: #{tpu_custom_call.1} parent=1 // pred_check_branch
      %31 = sbr.rel (0) target = $region13
    $region12: #{tpu_custom_call.1} parent=1 // pred_region
      %s33 = ssub.s32 16, 16
      %34 = vsyncadd [#allocation4], %s33
      %s36 = sshll.u32 [#allocation5], 4
      %s37 = int_to_ptr.vmem [resolvable:$true] %s36
      %39 = dma.vmem_to_hbm [thread:$0]  %s37, 16, %s1, [#allocation4]
    $region13: #{tpu_custom_call.1} parent=1 // pred_fallthru
      _
    // Predicated region
    $region14: #{tpu_custom_call.1} parent=1 // pred_check
      _
    $region15: #{tpu_custom_call.1} parent=1 // pred_check_branch
      %41 = sbr.rel (0) target = $region17
    $region16: #{tpu_custom_call.1} parent=1 // pred_region
      %42 = dma.done [#allocation4], 16
    $region17: #{tpu_custom_call.1} parent=1 // pred_fallthru
      _
    %43 = vsyncpa [#allocation3], 1
    %44 = vsyncpa [#allocation4], 1

</llo_original>
